<compile_context>
chip_gen: v7x
topology: tpu7x:2x2x1
jax: 0.10.0
libtpu: 0.0.40
codegen_flags: <defaults>
</compile_context>

<pallas_src>
import jax
import jax.numpy as jnp
from jax import lax
from jax.experimental import pallas as pl
from jax.experimental.pallas import tpu as pltpu


_VMEM_LIMIT_BYTES = 32 * 1024 * 1024   # budgeted against v7x 64 MiB physical


# --------------------------------------------------------------------------- #
# Kernels
# --------------------------------------------------------------------------- #

def _feat_kernel(h0_ref, w1t_ref, y1_ref):
    # Y1 row-tile = H0 row-tile @ W1^T   (K = d0, tiny; W1^T resident in VMEM)
    y1_ref[...] = jnp.dot(h0_ref[...], w1t_ref[...],
                          preferred_element_type=jnp.float32)


def _make_layer1_kernel(n_nodes, tk, needs_mask):
    """acc += A[i, k] @ Y1[k]; at last k: Y2[i] = ReLU(acc + b1) @ W2^T."""

    def kernel(a_ref, y1_ref, b1_ref, w2t_ref, y2_ref, acc_ref):
        k = pl.program_id(1)

        @pl.when(k == 0)
        def _():
            acc_ref[...] = jnp.zeros_like(acc_ref)

        a = a_ref[...]
        y = y1_ref[...]
        if needs_mask:
            # Edge K-tile: zero BOTH the out-of-range A columns and Y rows so
            # stale-VMEM garbage (possibly NaN) never reaches valid outputs.
            valid = n_nodes - k * tk
            col_ids = lax.broadcasted_iota(jnp.int32, a.shape, 1)
            a = jnp.where(col_ids < valid, a, 0.0)
            row_ids = lax.broadcasted_iota(jnp.int32, y.shape, 0)
            y = jnp.where(row_ids < valid, y, 0.0)

        acc_ref[...] += jnp.dot(a, y, preferred_element_type=jnp.float32)

        @pl.when(k == pl.num_programs(1) - 1)
        def _():
            h1 = jnp.maximum(acc_ref[...] + b1_ref[...], 0.0)
            y2_ref[...] = jnp.dot(h1, w2t_ref[...],
                                  preferred_element_type=jnp.float32)

    return kernel


def _make_layer2_kernel(n_nodes, tk, needs_mask):
    """H2[i] accumulated directly in the output block: H2[i] = A[i,:] @ Y2 + b2."""

    def kernel(a_ref, y2_ref, b2_ref, h2_ref):
        k = pl.program_id(1)

        @pl.when(k == 0)
        def _():
            h2_ref[...] = jnp.zeros_like(h2_ref)

        a = a_ref[...]
        y = y2_ref[...]
        if needs_mask:
            valid = n_nodes - k * tk
            col_ids = lax.broadcasted_iota(jnp.int32, a.shape, 1)
            a = jnp.where(col_ids < valid, a, 0.0)
            row_ids = lax.broadcasted_iota(jnp.int32, y.shape, 0)
            y = jnp.where(row_ids < valid, y, 0.0)

        h2_ref[...] += jnp.dot(a, y, preferred_element_type=jnp.float32)

        @pl.when(k == pl.num_programs(1) - 1)
        def _():
            h2_ref[...] += b2_ref[...]

    return kernel


def _decoder_kernel(h2i_ref, h2j_ref, recon_ref):
    # recon tile = sigmoid( H2[i-tile] @ H2[j-tile]^T ).  Contraction over the
    # last dim of both operands -> no transposed copy of H2 is materialized.
    logits = lax.dot_general(
        h2i_ref[...], h2j_ref[...],
        dimension_numbers=(((1,), (1,)), ((), ())),
        preferred_element_type=jnp.float32)
    # sigmoid(x) = 0.5 * tanh(0.5 * x) + 0.5 -> one EUP op per element.
    recon_ref[...] = (0.5 * jnp.tanh(0.5 * logits) + 0.5).astype(recon_ref.dtype)


# --------------------------------------------------------------------------- #
# Wrapper
# --------------------------------------------------------------------------- #

def my_gae_forward(adjacency_modified, h0, w1, b1, w2, b2,
                   *, tm=512, tn=1024, tk=1024):
    """GAE forward.  Weights are PyTorch layout: w1 [d1, d0], w2 [d2, d1]."""
    assert tm % 8 == 0 and tk % 128 == 0 and tn % 128 == 0, \
        "tm must be a multiple of 8; tk/tn multiples of 128"

    f32 = jnp.float32
    N = adjacency_modified.shape[0]
    d0 = h0.shape[1]
    d1 = w1.shape[0]
    d2 = w2.shape[0]

    A = adjacency_modified.astype(f32)
    H0 = h0.astype(f32)
    W1t = w1.astype(f32).T                     # (d0, d1) -- transpose once, in XLA
    W2t = w2.astype(f32).T                     # (d1, d2)
    b1 = jnp.reshape(b1, (1, d1)).astype(f32)
    b2 = jnp.reshape(b2, (1, d2)).astype(f32)

    # Clamp tiles to the array size (a block dim equal to the full array dim is
    # always legal regardless of (8,128) divisibility).  No jnp.pad, no slicing:
    # ragged edge tiles are handled by pl.cdiv grids + in-kernel K masking.
    tm_e = N if N <= tm else tm
    tk_e = N if N <= tk else tk
    tn_e = N if N <= tn else tn

    n_row = pl.cdiv(N, tm_e)      # encoder row tiles / decoder i tiles
    n_k = pl.cdiv(N, tk_e)        # reduction tiles over A's columns
    n_col = pl.cdiv(N, tn_e)      # decoder j tiles (lane-dense recon stores)
    needs_mask = (N % tk_e) != 0  # static: only emit masking when needed

    par = pltpu.CompilerParams(dimension_semantics=("parallel",),
                               vmem_limit_bytes=_VMEM_LIMIT_BYTES)
    par_arb = pltpu.CompilerParams(dimension_semantics=("parallel", "arbitrary"),
                                   vmem_limit_bytes=_VMEM_LIMIT_BYTES)
    par_par = pltpu.CompilerParams(dimension_semantics=("parallel", "parallel"),
                                   vmem_limit_bytes=_VMEM_LIMIT_BYTES)

    # 1) Y1 = H0 @ W1^T
    y1 = pl.pallas_call(
        _feat_kernel,
        out_shape=jax.ShapeDtypeStruct((N, d1), f32),
        grid=(n_row,),
        in_specs=[pl.BlockSpec((tm_e, d0), lambda i: (i, 0)),
                  pl.BlockSpec((d0, d1), lambda i: (0, 0))],
        out_specs=pl.BlockSpec((tm_e, d1), lambda i: (i, 0)),
        compiler_params=par,
    )(H0, W1t)

    # 2) Y2 = ReLU(A @ Y1 + b1) @ W2^T     (H1 never written to HBM)
    y2 = pl.pallas_call(
        _make_layer1_kernel(N, tk_e, needs_mask),
        out_shape=jax.ShapeDtypeStruct((N, d2), f32),
        grid=(n_row, n_k),
        in_specs=[pl.BlockSpec((tm_e, tk_e), lambda i, k: (i, k)),
                  pl.BlockSpec((tk_e, d1), lambda i, k: (k, 0)),
                  pl.BlockSpec((1, d1), lambda i, k: (0, 0)),
                  pl.BlockSpec((d1, d2), lambda i, k: (0, 0))],
        out_specs=pl.BlockSpec((tm_e, d2), lambda i, k: (i, 0)),
        scratch_shapes=[pltpu.VMEM((tm_e, d1), f32)],
        compiler_params=par_arb,
    )(A, y1, b1, W2t)

    # 3) H2 = A @ Y2 + b2   (latent representation; output block is the accumulator)
    h2 = pl.pallas_call(
        _make_layer2_kernel(N, tk_e, needs_mask),
        out_shape=jax.ShapeDtypeStruct((N, d2), f32),
        grid=(n_row, n_k),
        in_specs=[pl.BlockSpec((tm_e, tk_e), lambda i, k: (i, k)),
                  pl.BlockSpec((tk_e, d2), lambda i, k: (k, 0)),
                  pl.BlockSpec((1, d2), lambda i, k: (0, 0))],
        out_specs=pl.BlockSpec((tm_e, d2), lambda i, k: (i, 0)),
        compiler_params=par_arb,
    )(A, y2, b2)

    # 4) recon = sigmoid(H2 @ H2^T), written directly as (N, N).  H2 row tile for
    #    i stays VMEM-resident across the inner j axis; recon tiles are
    #    (tm_e, tn_e) with tn_e lane-dense (multiple of 128 or full N).
    recon = pl.pallas_call(
        _decoder_kernel,
        out_shape=jax.ShapeDtypeStruct((N, N), f32),
        grid=(n_row, n_col),
        in_specs=[pl.BlockSpec((tm_e, d2), lambda i, j: (i, 0)),
                  pl.BlockSpec((tn_e, d2), lambda i, j: (j, 0))],
        out_specs=pl.BlockSpec((tm_e, tn_e), lambda i, j: (i, j)),
        compiler_params=par_par,
    )(h2, h2)

    return recon, h2


# --------------------------------------------------------------------------- #
# Helpers / reference / test
# --------------------------------------------------------------------------- #

def get_weight_initial(key, out_dim, in_dim):
    # Deterministic stand-in for the repo's get_weight_initial (Glorot-ish uniform).
    bound = jnp.sqrt(6.0 / (out_dim + in_dim))
    return jax.random.uniform(key, (out_dim, in_dim), jnp.float32,
                              minval=-bound, maxval=bound)


def reference_forward(A, H0, w1, b1, w2, b2):
    H1 = jax.nn.relu((A @ H0) @ w1.T + b1)
    H2 = (A @ H1) @ w2.T + b2
    recon = jax.nn.sigmoid(H2 @ H2.T)
    return recon, H2


if __name__ == "__main__":
    # Small shapes consistent with the module: N nodes, feature dims d_0 > d_1 > d_2.
    # N deliberately NOT a multiple of 128 so the ragged-edge path is exercised.
    N, d_0, d_1, d_2 = 200, 32, 16, 8

    key = jax.random.PRNGKey(0)
    k_a, k_h, k_w1, k_b1, k_w2, k_b2 = jax.random.split(key, 6)

    # Symmetric, normalized-ish dense adjacency ("Adjacency_Modified").
    A_raw = jax.random.uniform(k_a, (N, N), jnp.float32)
    A = 0.5 * (A_raw + A_raw.T) / N + jnp.eye(N, dtype=jnp.float32)

    H0 = jax.random.normal(k_h, (N, d_0), jnp.float32)

    W1 = get_weight_initial(k_w1, d_1, d_0)            # Linear(d_0, d_1).weight
    b1 = jax.random.normal(k_b1, (1, d_1), jnp.float32) * 0.01
    W2 = get_weight_initial(k_w2, d_2, d_1)            # Linear(d_1, d_2).weight
    b2 = jax.random.normal(k_b2, (1, d_2), jnp.float32) * 0.01

    recon_ref, latent_ref = reference_forward(A, H0, W1, b1, W2, b2)

    # Default (production) tiles: at this small N everything is a single block.
    recon, latent = my_gae_forward(A, H0, W1, b1, W2, b2)
    jax.block_until_ready((recon, latent))
    assert recon.shape == (N, N) and latent.shape == (N, d_2)
    # Matmul reassociation (A @ (X @ W^T)) introduces f32-rounding-level
    # differences vs the (A @ X) @ W^T reference.
    assert jnp.allclose(latent, latent_ref, atol=1e-4, rtol=1e-4)
    assert jnp.allclose(recon, recon_ref, atol=1e-4, rtol=1e-4)

    # Small forced tiles: exercises multi-tile grids, K accumulation, and the
    # ragged edge-tile masking (200 % 128 != 0).
    recon_s, latent_s = my_gae_forward(A, H0, W1, b1, W2, b2,
                                       tm=64, tn=128, tk=128)
    jax.block_until_ready((recon_s, latent_s))
    assert jnp.allclose(latent_s, latent_ref, atol=1e-4, rtol=1e-4)
    assert jnp.allclose(recon_s, recon_ref, atol=1e-4, rtol=1e-4)

    print("KERNEL_OK")
</pallas_src>

<mosaic_0001>
module attributes {stable_mosaic.version = 11 : i64} {
  func.func @_feat_kernel(%arg0: i32, %arg1: memref<200x32xf32, #tpu.memory_space<vmem>>, %arg2: memref<32x16xf32, #tpu.memory_space<vmem>>, %arg3: memref<200x16xf32, #tpu.memory_space<vmem>>) attributes {dimension_semantics = [#tpu.dimension_semantics<parallel>], iteration_bounds = array<i64: 1>, scalar_prefetch = 0 : i64, scratch_operands = 0 : i64, tpu.core_type = #tpu.core_type<tc>, window_params = [{transform_indices = @transform_0, window_bounds = array<i64: 200, 32>}, {pipeline_mode = #tpu.pipeline_mode<synchronous>, transform_indices = @transform_1, window_bounds = array<i64: 32, 16>}, {transform_indices = @transform_2, window_bounds = array<i64: 200, 16>}]} {
    %c0 = arith.constant 0 : index
    %c0_0 = arith.constant 0 : index
    %0 = vector.load %arg1[%c0, %c0_0] : memref<200x32xf32, #tpu.memory_space<vmem>>, vector<200x32xf32>
    %c0_1 = arith.constant 0 : index
    %c0_2 = arith.constant 0 : index
    %1 = vector.load %arg2[%c0_1, %c0_2] : memref<32x16xf32, #tpu.memory_space<vmem>>, vector<32x16xf32>
    %cst = arith.constant dense<0.000000e+00> : vector<200x16xf32>
    %2 = tpu.matmul %0, %1, %cst {dimension_numbers = #tpu.dot_dimension_numbers<[1], [0], [0], [1], [0, 0, 1, 1], [], []>} : vector<200x32xf32>, vector<32x16xf32>, vector<200x16xf32> -> vector<200x16xf32>
    %c0_3 = arith.constant 0 : index
    %c0_4 = arith.constant 0 : index
    %3 = vector.load %arg3[%c0_3, %c0_4] : memref<200x16xf32, #tpu.memory_space<vmem>>, vector<200x16xf32>
    tpu.vector_store %arg3[%c0_3, %c0_4], %2 {strides = array<i32>} : memref<200x16xf32, #tpu.memory_space<vmem>>, vector<200x16xf32>,
    return
  }
  func.func @transform_0(%arg0: i32) -> (i32, i32) {
    %c0_i32 = arith.constant 0 : i32
    %c0_i32_0 = arith.constant 0 : i32
    return %arg0, %c0_i32 : i32, i32
  }
  func.func @transform_1(%arg0: i32) -> (i32, i32) {
    %c0_i32 = arith.constant 0 : i32
    %c0_i32_0 = arith.constant 0 : i32
    %c0_i32_1 = arith.constant 0 : i32
    return %c0_i32, %c0_i32_0 : i32, i32
  }
  func.func @transform_2(%arg0: i32) -> (i32, i32) {
    %c0_i32 = arith.constant 0 : i32
    %c0_i32_0 = arith.constant 0 : i32
    return %arg0, %c0_i32 : i32, i32
  }
}

</mosaic_0001>

<llo_original>
// kernel: tpu_custom_call.1
$region0: #{tpu_custom_call.1}
  #allocation0 [shape = 'u32[]', space=smem, size = 0x4, offset = 0x4, fixed_abs, tag = 'smem constant byte address 0x4 - core index']
  #allocation1 [shape = 'u32[144,128]{1,0:T(1,128)}', space=vmem, size = 0x12000, scoped, tag = 'internal scratch']
  %s0 = inlined_call_operand.vmem [shape: f32[200,32], index: 0, kind: input, shape index: {}]
  %s1 = inlined_call_operand.vmem [shape: f32[32,16], index: 1, kind: input, shape index: {}]
  %s2 = inlined_call_operand.vmem [shape: f32[200,16], index: 2, kind: output, shape index: {}]
  %s3 = sld [smem:[#allocation0]]
  $region18: #{tpu_custom_call.1} parent=0
    _
  %s5 = ssub.s32 1, %s3
  %s6 = scalar_select 0, %s5, %s3
  // Predicated region
  $region2: #{tpu_custom_call.1} parent=0 // pred_check
    _
  $region3: #{tpu_custom_call.1} parent=0 // pred_check_branch
    %8 = sbr.rel (0) target = $region5
  $region4: #{tpu_custom_call.1} parent=0 // pred_region
    _
  $region5: #{tpu_custom_call.1} parent=0 // pred_fallthru
    _
  // Predicated region
  $region6: #{tpu_custom_call.1} parent=0 // pred_check
    _
  $region7: #{tpu_custom_call.1} parent=0 // pred_check_branch
    %10 = sbr.rel (0) target = $region9
  $region8: #{tpu_custom_call.1} parent=0 // pred_region
    _
  $region9: #{tpu_custom_call.1} parent=0 // pred_fallthru
    _
  %v11 = vld [vmem:[%s0] sm:$0xff]
  %v12 = vld [vmem:[%s0 + $0x8] sm:$0xff]
  %v13 = vld [vmem:[%s0 + $0x10] sm:$0xff]
  %v14 = vld [vmem:[%s0 + $0x18] sm:$0xff]
  %v15 = vld [vmem:[%s0 + $0x20] sm:$0xff]
  %v16 = vld [vmem:[%s0 + $0x28] sm:$0xff]
  %v17 = vld [vmem:[%s0 + $0x30] sm:$0xff]
  %v18 = vld [vmem:[%s0 + $0x38] sm:$0xff]
  %v19 = vld [vmem:[%s0 + $0x40] sm:$0xff]
  %v20 = vld [vmem:[%s0 + $0x48] sm:$0xff]
  %v21 = vld [vmem:[%s0 + $0x50] sm:$0xff]
  %v22 = vld [vmem:[%s0 + $0x58] sm:$0xff]
  %v23 = vld [vmem:[%s0 + $0x60] sm:$0xff]
  %v24 = vld [vmem:[%s0 + $0x68] sm:$0xff]
  %v25 = vld [vmem:[%s0 + $0x70] sm:$0xff]
  %v26 = vld [vmem:[%s0 + $0x78] sm:$0xff]
  %v27 = vld [vmem:[%s0 + $0x80] sm:$0xff]
  %v28 = vld [vmem:[%s0 + $0x88] sm:$0xff]
  %v29 = vld [vmem:[%s0 + $0x90] sm:$0xff]
  %v30 = vld [vmem:[%s0 + $0x98] sm:$0xff]
  %v31 = vld [vmem:[%s0 + $0xa0] sm:$0xff]
  %v32 = vld [vmem:[%s0 + $0xa8] sm:$0xff]
  %v33 = vld [vmem:[%s0 + $0xb0] sm:$0xff]
  %v34 = vld [vmem:[%s0 + $0xb8] sm:$0xff]
  %v35 = vld [vmem:[%s0 + $0xc0] sm:$0xff]
  %v36 = vld [vmem:[%s1] sm:$0xff]
  %v37 = vld [vmem:[%s1 + $0x8] sm:$0xff]
  %v38 = vld [vmem:[%s1 + $0x10] sm:$0xff]
  %v39 = vld [vmem:[%s1 + $0x18] sm:$0xff]
  %vm40 = vcmask 261120
  %v42 = vsel %vm40, %v11, 0
  %v45 = vsel %vm40, %v12, 0
  %v48 = vsel %vm40, %v13, 0
  %v51 = vsel %vm40, %v14, 0
  %v54 = vsel %vm40, %v15, 0
  %v57 = vsel %vm40, %v16, 0
  %v60 = vsel %vm40, %v17, 0
  %v63 = vsel %vm40, %v18, 0
  %v66 = vsel %vm40, %v19, 0
  %v69 = vsel %vm40, %v20, 0
  %v72 = vsel %vm40, %v21, 0
  %v75 = vsel %vm40, %v22, 0
  %v78 = vsel %vm40, %v23, 0
  %v81 = vsel %vm40, %v24, 0
  %v84 = vsel %vm40, %v25, 0
  %v87 = vsel %vm40, %v26, 0
  %v90 = vsel %vm40, %v27, 0
  %v93 = vsel %vm40, %v28, 0
  %v96 = vsel %vm40, %v29, 0
  %v99 = vsel %vm40, %v30, 0
  %v102 = vsel %vm40, %v31, 0
  %v105 = vsel %vm40, %v32, 0
  %v108 = vsel %vm40, %v33, 0
  %v111 = vsel %vm40, %v34, 0
  %v114 = vsel %vm40, %v35, 0
  %116 = vmatprep.subr.mxu0 0.0
  %117 = vmatpush1.msra.mxu0 %v36
  %118 = vmatprep.subr.mxu0 0.0
  %119 = vmatpush1.msra.mxu0 %v37
  %120 = vmatprep.subr.mxu0 0.0
  %121 = vmatpush1.msra.mxu0 %v38
  %122 = vmatprep.subr.mxu0 0.0
  %123 = vmatpush1.msra.mxu0 %v39
  %124 = vmatprep.subr.mxu0 0.0
  %125 = vmatpush1.msra.mxu0 0.0
  %126 = vmatprep.subr.mxu0 0.0
  %127 = vmatpush1.msra.mxu0 0.0
  %128 = vmatprep.subr.mxu0 0.0
  %129 = vmatpush1.msra.mxu0 0.0
  %130 = vmatprep.subr.mxu0 0.0
  %131 = vmatpush1.msra.mxu0 0.0
  %132 = vmatprep.subr.mxu0 0.0
  %133 = vmatpush1.msra.mxu0 0.0
  %134 = vmatprep.subr.mxu0 0.0
  %135 = vmatpush1.msra.mxu0 0.0
  %136 = vmatprep.subr.mxu0 0.0
  %137 = vmatpush1.msra.mxu0 0.0
  %138 = vmatprep.subr.mxu0 0.0
  %139 = vmatpush1.msra.mxu0 0.0
  %140 = vmatprep.subr.mxu0 0.0
  %141 = vmatpush1.msra.mxu0 0.0
  %142 = vmatprep.subr.mxu0 0.0
  %143 = vmatpush1.msra.mxu0 0.0
  %144 = vmatprep.subr.mxu0 0.0
  %145 = vmatpush1.msra.mxu0 0.0
  %146 = vmatprep.subr.mxu0 0.0
  %147 = vmatpush1.msra.mxu0 0.0
  %148 = vmatprep.subr.mxu0 0.0
  %149 = vmatpush1.msra.mxu0 0.0
  %150 = vmatprep.subr.mxu0 0.0
  %151 = vmatpush1.msra.mxu0 0.0
  %152 = vmatprep.subr.mxu0 0.0
  %153 = vmatpush1.msra.mxu0 0.0
  %154 = vmatprep.subr.mxu0 0.0
  %155 = vmatpush1.msra.mxu0 0.0
  %156 = vmatprep.subr.mxu0 0.0
  %157 = vmatpush1.msra.mxu0 0.0
  %158 = vmatprep.subr.mxu0 0.0
  %159 = vmatpush1.msra.mxu0 0.0
  %160 = vmatprep.subr.mxu0 0.0
  %161 = vmatpush1.msra.mxu0 0.0
  %162 = vmatprep.subr.mxu0 0.0
  %163 = vmatpush1.msra.mxu0 0.0
  %164 = vmatprep.subr.mxu0 0.0
  %165 = vmatpush1.msra.mxu0 0.0
  %166 = vmatprep.subr.mxu0 0.0
  %167 = vmatpush1.msra.mxu0 0.0
  %168 = vmatprep.subr.mxu0 0.0
  %169 = vmatpush1.msra.mxu0 0.0
  %170 = vmatprep.subr.mxu0 0.0
  %171 = vmatpush1.msra.mxu0 0.0
  %172 = vmatprep.subr.mxu0 0.0
  %173 = vmatpush1.msra.mxu0 0.0
  %174 = vmatprep.subr.mxu0 0.0
  %175 = vmatpush1.msra.mxu0 0.0
  %176 = vmatprep.subr.mxu0 0.0
  %177 = vmatpush1.msra.mxu0 0.0
  %178 = vmatprep.subr.mxu0 0.0
  %179 = vmatpush1.msra.mxu0 0.0
  %180 = vmatprep.mubr.f32.mxu0 0.0
  %181 = vmatmul.mubr.f32.gmra.mrb[0].mxu0 %v42
  %v182 = vpop.f32.mrb[0].mxu0
  %v183 = vadd.f32 0.0, %v182
  %v184 = vpop.f32.mrb[0].mxu0
  %185 = vmatprep.mubr.f32.mxu0 0.0
  %186 = vmatmul.mubr.f32.gmra.mrb[0].mxu0 %v45
  %v187 = vpop.f32.mrb[0].mxu0
  %v188 = vadd.f32 0.0, %v187
  %v189 = vpop.f32.mrb[0].mxu0
  %190 = vmatprep.mubr.f32.mxu0 0.0
  %191 = vmatmul.mubr.f32.gmra.mrb[0].mxu0 %v48
  %v192 = vpop.f32.mrb[0].mxu0
  %v193 = vadd.f32 0.0, %v192
  %v194 = vpop.f32.mrb[0].mxu0
  %195 = vmatprep.mubr.f32.mxu0 0.0
  %196 = vmatmul.mubr.f32.gmra.mrb[0].mxu0 %v51
  %v197 = vpop.f32.mrb[0].mxu0
  %v198 = vadd.f32 0.0, %v197
  %v199 = vpop.f32.mrb[0].mxu0
  %200 = vmatprep.mubr.f32.mxu0 0.0
  %201 = vmatmul.mubr.f32.gmra.mrb[0].mxu0 %v54
  %v202 = vpop.f32.mrb[0].mxu0
  %v203 = vadd.f32 0.0, %v202
  %v204 = vpop.f32.mrb[0].mxu0
  %205 = vmatprep.mubr.f32.mxu0 0.0
  %206 = vmatmul.mubr.f32.gmra.mrb[0].mxu0 %v57
  %v207 = vpop.f32.mrb[0].mxu0
  %v208 = vadd.f32 0.0, %v207
  %v209 = vpop.f32.mrb[0].mxu0
  %210 = vmatprep.mubr.f32.mxu0 0.0
  %211 = vmatmul.mubr.f32.gmra.mrb[0].mxu0 %v60
  %v212 = vpop.f32.mrb[0].mxu0
  %v213 = vadd.f32 0.0, %v212
  %v214 = vpop.f32.mrb[0].mxu0
  %215 = vmatprep.mubr.f32.mxu0 0.0
  %216 = vmatmul.mubr.f32.gmra.mrb[0].mxu0 %v63
  %v217 = vpop.f32.mrb[0].mxu0
  %v218 = vadd.f32 0.0, %v217
  %v219 = vpop.f32.mrb[0].mxu0
  %220 = vmatprep.mubr.f32.mxu0 0.0
  %221 = vmatmul.mubr.f32.gmra.mrb[0].mxu0 %v66
  %v222 = vpop.f32.mrb[0].mxu0
  %v223 = vadd.f32 0.0, %v222
  %v224 = vpop.f32.mrb[0].mxu0
  %225 = vmatprep.mubr.f32.mxu0 0.0
  %226 = vmatmul.mubr.f32.gmra.mrb[0].mxu0 %v69
  %v227 = vpop.f32.mrb[0].mxu0
  %v228 = vadd.f32 0.0, %v227
  %v229 = vpop.f32.mrb[0].mxu0
  %230 = vmatprep.mubr.f32.mxu0 0.0
  %231 = vmatmul.mubr.f32.gmra.mrb[0].mxu0 %v72
  %v232 = vpop.f32.mrb[0].mxu0
  %v233 = vadd.f32 0.0, %v232
  %v234 = vpop.f32.mrb[0].mxu0
  %235 = vmatprep.mubr.f32.mxu0 0.0
  %236 = vmatmul.mubr.f32.gmra.mrb[0].mxu0 %v75
  %v237 = vpop.f32.mrb[0].mxu0
  %v238 = vadd.f32 0.0, %v237
  %v239 = vpop.f32.mrb[0].mxu0
  %240 = vmatprep.mubr.f32.mxu0 0.0
  %241 = vmatmul.mubr.f32.gmra.mrb[0].mxu0 %v78
  %v242 = vpop.f32.mrb[0].mxu0
  %v243 = vadd.f32 0.0, %v242
  %v244 = vpop.f32.mrb[0].mxu0
  %245 = vmatprep.mubr.f32.mxu0 0.0
  %246 = vmatmul.mubr.f32.gmra.mrb[0].mxu0 %v81
  %v247 = vpop.f32.mrb[0].mxu0
  %v248 = vadd.f32 0.0, %v247
  %v249 = vpop.f32.mrb[0].mxu0
  %250 = vmatprep.mubr.f32.mxu0 0.0
  %251 = vmatmul.mubr.f32.gmra.mrb[0].mxu0 %v84
  %v252 = vpop.f32.mrb[0].mxu0
  %v253 = vadd.f32 0.0, %v252
  %v254 = vpop.f32.mrb[0].mxu0
  %255 = vmatprep.mubr.f32.mxu0 0.0
  %256 = vmatmul.mubr.f32.gmra.mrb[0].mxu0 %v87
  %v257 = vpop.f32.mrb[0].mxu0
  %v258 = vadd.f32 0.0, %v257
  %v259 = vpop.f32.mrb[0].mxu0
  %260 = vmatprep.mubr.f32.mxu0 0.0
  %261 = vmatmul.mubr.f32.gmra.mrb[0].mxu0 %v90
  %v262 = vpop.f32.mrb[0].mxu0
  %v263 = vadd.f32 0.0, %v262
  %v264 = vpop.f32.mrb[0].mxu0
  %265 = vmatprep.mubr.f32.mxu0 0.0
  %266 = vmatmul.mubr.f32.gmra.mrb[0].mxu0 %v93
  %v267 = vpop.f32.mrb[0].mxu0
  %v268 = vadd.f32 0.0, %v267
  %v269 = vpop.f32.mrb[0].mxu0
  %270 = vmatprep.mubr.f32.mxu0 0.0
  %271 = vmatmul.mubr.f32.gmra.mrb[0].mxu0 %v96
  %v272 = vpop.f32.mrb[0].mxu0
  %v273 = vadd.f32 0.0, %v272
  %v274 = vpop.f32.mrb[0].mxu0
  %275 = vmatprep.mubr.f32.mxu0 0.0
  %276 = vmatmul.mubr.f32.gmra.mrb[0].mxu0 %v99
  %v277 = vpop.f32.mrb[0].mxu0
  %v278 = vadd.f32 0.0, %v277
  %v279 = vpop.f32.mrb[0].mxu0
  %280 = vmatprep.mubr.f32.mxu0 0.0
  %281 = vmatmul.mubr.f32.gmra.mrb[0].mxu0 %v102
  %v282 = vpop.f32.mrb[0].mxu0
  %v283 = vadd.f32 0.0, %v282
  %v284 = vpop.f32.mrb[0].mxu0
  %285 = vmatprep.mubr.f32.mxu0 0.0
  %286 = vmatmul.mubr.f32.gmra.mrb[0].mxu0 %v105
  %v287 = vpop.f32.mrb[0].mxu0
  %v288 = vadd.f32 0.0, %v287
  %v289 = vpop.f32.mrb[0].mxu0
  %290 = vmatprep.mubr.f32.mxu0 0.0
  %291 = vmatmul.mubr.f32.gmra.mrb[0].mxu0 %v108
  %v292 = vpop.f32.mrb[0].mxu0
  %v293 = vadd.f32 0.0, %v292
  %v294 = vpop.f32.mrb[0].mxu0
  %295 = vmatprep.mubr.f32.mxu0 0.0
  %296 = vmatmul.mubr.f32.gmra.mrb[0].mxu0 %v111
  %v297 = vpop.f32.mrb[0].mxu0
  %v298 = vadd.f32 0.0, %v297
  %v299 = vpop.f32.mrb[0].mxu0
  %300 = vmatprep.mubr.f32.mxu0 0.0
  %301 = vmatmul.mubr.f32.gmra.mrb[0].mxu0 %v114
  %v302 = vpop.f32.mrb[0].mxu0
  %v303 = vadd.f32 0.0, %v302
  %v304 = vpop.f32.mrb[0].mxu0
  %305 = vdwg.mxu0
  %vm306 = vcmask 130048
  %307 = vst.msk [vmem:[%s2] sm:$0xff] %vm306, %v183
  %308 = vst.msk [vmem:[%s2 + $0x8] sm:$0xff] %vm306, %v188
  %309 = vst.msk [vmem:[%s2 + $0x10] sm:$0xff] %vm306, %v193
  %310 = vst.msk [vmem:[%s2 + $0x18] sm:$0xff] %vm306, %v198
  %311 = vst.msk [vmem:[%s2 + $0x20] sm:$0xff] %vm306, %v203
  %312 = vst.msk [vmem:[%s2 + $0x28] sm:$0xff] %vm306, %v208
  %313 = vst.msk [vmem:[%s2 + $0x30] sm:$0xff] %vm306, %v213
  %314 = vst.msk [vmem:[%s2 + $0x38] sm:$0xff] %vm306, %v218
  %315 = vst.msk [vmem:[%s2 + $0x40] sm:$0xff] %vm306, %v223
  %316 = vst.msk [vmem:[%s2 + $0x48] sm:$0xff] %vm306, %v228
  %317 = vst.msk [vmem:[%s2 + $0x50] sm:$0xff] %vm306, %v233
  %318 = vst.msk [vmem:[%s2 + $0x58] sm:$0xff] %vm306, %v238
  %319 = vst.msk [vmem:[%s2 + $0x60] sm:$0xff] %vm306, %v243
  %320 = vst.msk [vmem:[%s2 + $0x68] sm:$0xff] %vm306, %v248
  %321 = vst.msk [vmem:[%s2 + $0x70] sm:$0xff] %vm306, %v253
  %322 = vst.msk [vmem:[%s2 + $0x78] sm:$0xff] %vm306, %v258
  %323 = vst.msk [vmem:[%s2 + $0x80] sm:$0xff] %vm306, %v263
  %324 = vst.msk [vmem:[%s2 + $0x88] sm:$0xff] %vm306, %v268
  %325 = vst.msk [vmem:[%s2 + $0x90] sm:$0xff] %vm306, %v273
  %326 = vst.msk [vmem:[%s2 + $0x98] sm:$0xff] %vm306, %v278
  %327 = vst.msk [vmem:[%s2 + $0xa0] sm:$0xff] %vm306, %v283
  %328 = vst.msk [vmem:[%s2 + $0xa8] sm:$0xff] %vm306, %v288
  %329 = vst.msk [vmem:[%s2 + $0xb0] sm:$0xff] %vm306, %v293
  %330 = vst.msk [vmem:[%s2 + $0xb8] sm:$0xff] %vm306, %v298
  %331 = vst.msk [vmem:[%s2 + $0xc0] sm:$0xff] %vm306, %v303
  // Predicated region
  $region10: #{tpu_custom_call.1} parent=0 // pred_check
    _
  $region11: #{tpu_custom_call.1} parent=0 // pred_check_branch
    %333 = sbr.rel (0) target = $region13
  $region12: #{tpu_custom_call.1} parent=0 // pred_region
    _
  $region13: #{tpu_custom_call.1} parent=0 // pred_fallthru
    _
  // Predicated region
  $region14: #{tpu_custom_call.1} parent=0 // pred_check
    _
  $region15: #{tpu_custom_call.1} parent=0 // pred_check_branch
    %335 = sbr.rel (0) target = $region17
  $region16: #{tpu_custom_call.1} parent=0 // pred_region
    _
  $region17: #{tpu_custom_call.1} parent=0 // pred_fallthru
    _

</llo_original>
